<compile_context>
chip_gen: v5e
topology: v5e:2x2
jax: 0.10.0
libtpu: 0.0.40
codegen_flags: <defaults>
</compile_context>

<pallas_src>
import jax
import jax.numpy as jnp
from jax.experimental import pallas as pl
from jax.experimental.pallas import tpu as pltpu


def _round_up(x, m):
    return ((x + m - 1) // m) * m


def _gemm_bias_relu_kernel(w_ref, p_ref, b_ref, o_ref):
    # w_ref: (TO, CKK)      bf16  BN-scaled conv weights (out-channel tile)
    # p_ref: (1, CKK, THW)  bf16  im2col patches (one image / spatial tile)
    # b_ref: (TO, 1)        f32   folded BN bias
    # o_ref: (1, TO, THW)
    acc = jnp.dot(w_ref[...], p_ref[0], preferred_element_type=jnp.float32)
    o_ref[0] = jnp.maximum(acc + b_ref[...], 0.0).astype(o_ref.dtype)


def basic_conv(x, w, gamma, beta, running_mean, running_var, *,
               stride=1, padding=1, eps=1e-5, out_dtype=jnp.float32):
    """Conv2d(bias=False) + BatchNorm2d(eval) + ReLU.  x: (N, C, H, W) f32."""
    N, C, H, W = x.shape
    O, Cw, KH, KW = w.shape
    assert Cw == C, "groups != 1 not supported"

    # ---- spatial padding (wrapper glue) ------------------------------------
    x_pad = jnp.pad(x, ((0, 0), (0, 0), (padding, padding), (padding, padding)))
    Hp, Wp = H + 2 * padding, W + 2 * padding
    Ho = (Hp - KH) // stride + 1
    Wo = (Wp - KW) // stride + 1
    HW = Ho * Wo

    # ---- fold BN (running stats) into weights + per-channel bias -----------
    scale = gamma / jnp.sqrt(running_var + eps)                   # (O,)
    bias = (beta - running_mean * scale).astype(jnp.float32)      # (O,)
    w_scaled = w * scale[:, None, None, None]                     # (O, C, KH, KW)

    CKK = C * KH * KW
    w_mat = w_scaled.reshape(O, CKK).astype(jnp.bfloat16)         # (O, CKK)

    # ---- im2col built directly in (N, CKK, Ho*Wo) order (no transposes) ----
    taps = [
        x_pad[:, :,
              kh: kh + stride * (Ho - 1) + 1: stride,
              kw: kw + stride * (Wo - 1) + 1: stride]
        for kh in range(KH) for kw in range(KW)
    ]                                                             # each (N, C, Ho, Wo)
    patches = jnp.stack(taps, axis=2)                             # (N, C, KH*KW, Ho, Wo)
    patches = patches.reshape(N, CKK, HW).astype(jnp.bfloat16)    # c*KH*KW + kh*KW + kw

    # ---- output-channel tiling ----------------------------------------------
    # Keep the whole weight matrix VMEM-resident when small; otherwise tile O
    # on the innermost grid axis (patch block index is constant along it, so
    # the im2col tensor is never re-streamed per output-channel tile).
    O8 = _round_up(O, 8)
    if O8 * CKK * 2 <= 2 * (1 << 20):          # bf16 weights <= 2 MiB -> resident
        TO, O_pad = O8, O8
    else:
        TO = 256                                # MXU-friendly on v6e/v7x
        O_pad = _round_up(O, TO)

    # ---- spatial (lane) tiling: biggest 128-multiple <= 512 fitting budget --
    out_itemsize = jnp.dtype(out_dtype).itemsize

    def footprint(t):
        return (2 * CKK * t * 2                 # patches block, double-buffered
                + 2 * TO * CKK * 2              # weight block
                + 2 * TO * t * out_itemsize     # output block
                + 2 * TO * 4)                   # bias

    budget = 24 * (1 << 20)                     # safe for v7x 64 MiB physical VMEM
    T_HW = min(512, _round_up(HW, 128))
    while footprint(T_HW) > budget and T_HW > 128:
        T_HW -= 128
    HW_pad = _round_up(HW, T_HW)

    # keep >= 2 parallel blocks so both v7x TensorCores get work
    if N * (HW_pad // T_HW) < 2 and T_HW > 128:
        T_HW = _round_up(T_HW // 2, 128)
        HW_pad = _round_up(HW, T_HW)

    # ---- padding (only when actually needed) --------------------------------
    if HW_pad != HW:
        patches = jnp.pad(patches, ((0, 0), (0, 0), (0, HW_pad - HW)))
    if O_pad != O:
        w_mat = jnp.pad(w_mat, ((0, O_pad - O), (0, 0)))
        bias = jnp.pad(bias, ((0, O_pad - O),))
    bias_col = bias.reshape(O_pad, 1)

    grid = (N, HW_pad // T_HW, O_pad // TO)     # (image, spatial tile, out-ch tile)

    vmem_limit = int(min(max(2 * footprint(T_HW), 16 * (1 << 20)), 40 * (1 << 20)))

    out = pl.pallas_call(
        _gemm_bias_relu_kernel,
        out_shape=jax.ShapeDtypeStruct((N, O_pad, HW_pad), out_dtype),
        grid_spec=pltpu.PrefetchScalarGridSpec(
            num_scalar_prefetch=0,
            grid=grid,
            in_specs=[
                # weights: tiny, re-fetched only along the (innermost) O axis
                pl.BlockSpec((TO, CKK), lambda n, j, i: (i, 0)),
                # patches: index constant along the innermost O axis -> each
                # spatial tile is DMA'd from HBM exactly once
                pl.BlockSpec((1, CKK, T_HW), lambda n, j, i: (n, 0, j)),
                # folded BN bias
                pl.BlockSpec((TO, 1), lambda n, j, i: (i, 0)),
            ],
            out_specs=pl.BlockSpec((1, TO, T_HW), lambda n, j, i: (n, i, j)),
        ),
        compiler_params=pltpu.CompilerParams(
            dimension_semantics=("parallel", "parallel", "arbitrary"),
            vmem_limit_bytes=vmem_limit,
        ),
    )(w_mat, patches, bias_col)

    # Padded HW columns hold relu(bias) and padded O rows hold garbage; they
    # are sliced off here.  The reshape is contiguous -> no transpose needed.
    return out[:, :O, :HW].reshape(N, O, Ho, Wo)


def _reference(x, w, gamma, beta, running_mean, running_var, *,
               stride=1, padding=1, eps=1e-5):
    y = jax.lax.conv_general_dilated(
        x, w, window_strides=(stride, stride),
        padding=[(padding, padding), (padding, padding)],
        dimension_numbers=("NCHW", "OIHW", "NCHW"),
    )
    scale = gamma / jnp.sqrt(running_var + eps)
    shift = beta - running_mean * scale
    y = y * scale[None, :, None, None] + shift[None, :, None, None]
    return jnp.maximum(y, 0.0)


if __name__ == "__main__":
    # BasicConv(in_planes=4, out_planes=8, kernel_size=3, padding=1,
    #           relu=True, bn=True, bias=False)
    N, C, H, W = 2, 4, 16, 16
    O, K = 8, 3

    key = jax.random.PRNGKey(0)
    kx, kw, kg, kb = jax.random.split(key, 4)

    x = jax.random.normal(kx, (N, C, H, W), dtype=jnp.float32)
    w = jax.random.normal(kw, (O, C, K, K), dtype=jnp.float32) * 0.1
    gamma = 1.0 + 0.1 * jax.random.normal(kg, (O,), dtype=jnp.float32)
    beta = 0.1 * jax.random.normal(kb, (O,), dtype=jnp.float32)
    running_mean = jnp.zeros((O,), dtype=jnp.float32)
    running_var = jnp.ones((O,), dtype=jnp.float32)

    out = basic_conv(x, w, gamma, beta, running_mean, running_var,
                     stride=1, padding=1)
    out = jax.block_until_ready(out)

    ref = _reference(x, w, gamma, beta, running_mean, running_var,
                     stride=1, padding=1)
    assert out.shape == (N, O, H, W), out.shape
    max_err = float(jnp.max(jnp.abs(out - ref)))
    # bf16 MXU operands vs f32 reference -> loose but safe tolerance.
    assert max_err < 5e-2, f"max abs err {max_err}"

    print("KERNEL_OK")
</pallas_src>

<mosaic_0001>
module attributes {stable_mosaic.version = 11 : i64} {
  func.func @_gemm_bias_relu_kernel(%arg0: i32, %arg1: i32, %arg2: i32, %arg3: memref<8x36xbf16, #tpu.memory_space<vmem>>, %arg4: memref<1x36x256xbf16, #tpu.memory_space<vmem>>, %arg5: memref<8x1xf32, #tpu.memory_space<vmem>>, %arg6: memref<1x8x256xf32, #tpu.memory_space<vmem>>) attributes {dimension_semantics = [#tpu.dimension_semantics<parallel>, #tpu.dimension_semantics<parallel>, #tpu.dimension_semantics<arbitrary>], iteration_bounds = array<i64: 2, 1, 1>, scalar_prefetch = 0 : i64, scratch_operands = 0 : i64, tpu.core_type = #tpu.core_type<tc>, window_params = [{transform_indices = @transform_0, window_bounds = array<i64: 8, 36>}, {transform_indices = @transform_1, window_bounds = array<i64: 1, 36, 256>}, {transform_indices = @transform_2, window_bounds = array<i64: 8, 1>}, {transform_indices = @transform_3, window_bounds = array<i64: 1, 8, 256>}]} {
    %c0 = arith.constant 0 : index
    %c0_0 = arith.constant 0 : index
    %0 = vector.load %arg3[%c0, %c0_0] : memref<8x36xbf16, #tpu.memory_space<vmem>>, vector<8x36xbf16>
    %c0_1 = arith.constant 0 : index
    %c0_2 = arith.constant 0 : index
    %c0_3 = arith.constant 0 : index
    %1 = vector.load %arg4[%c0_1, %c0_2, %c0_3] : memref<1x36x256xbf16, #tpu.memory_space<vmem>>, vector<1x36x256xbf16>
    %2 = vector.shape_cast %1 : vector<1x36x256xbf16> to vector<36x256xbf16>
    %cst = arith.constant dense<0.000000e+00> : vector<8x256xf32>
    %3 = tpu.matmul %0, %2, %cst {dimension_numbers = #tpu.dot_dimension_numbers<[1], [0], [0], [1], [0, 0, 1, 1], [], []>} : vector<8x36xbf16>, vector<36x256xbf16>, vector<8x256xf32> -> vector<8x256xf32>
    %c0_4 = arith.constant 0 : index
    %c0_5 = arith.constant 0 : index
    %4 = vector.load %arg5[%c0_4, %c0_5] : memref<8x1xf32, #tpu.memory_space<vmem>>, vector<8x1xf32>
    %5 = vector.broadcast %4 : vector<8x1xf32> to vector<8x256xf32>
    %6 = arith.addf %3, %5 : vector<8x256xf32>
    %cst_6 = arith.constant 0.000000e+00 : f32
    %7 = vector.broadcast %cst_6 : f32 to vector<8x256xf32>
    %8 = arith.maximumf %6, %7 : vector<8x256xf32>
    %c0_7 = arith.constant 0 : index
    %c0_8 = arith.constant 0 : index
    %c0_9 = arith.constant 0 : index
    %9 = vector.load %arg6[%c0_7, %c0_8, %c0_9] : memref<1x8x256xf32, #tpu.memory_space<vmem>>, vector<1x8x256xf32>
    %10 = vector.shape_cast %9 : vector<1x8x256xf32> to vector<8x256xf32>
    %11 = vector.shape_cast %8 : vector<8x256xf32> to vector<1x8x256xf32>
    tpu.vector_store %arg6[%c0_7, %c0_8, %c0_9], %11 {strides = array<i32>} : memref<1x8x256xf32, #tpu.memory_space<vmem>>, vector<1x8x256xf32>,
    return
  }
  func.func @transform_0(%arg0: i32, %arg1: i32, %arg2: i32) -> (i32, i32) {
    %c0_i32 = arith.constant 0 : i32
    %c0_i32_0 = arith.constant 0 : i32
    return %arg2, %c0_i32 : i32, i32
  }
  func.func @transform_1(%arg0: i32, %arg1: i32, %arg2: i32) -> (i32, i32, i32) {
    %c0_i32 = arith.constant 0 : i32
    %c0_i32_0 = arith.constant 0 : i32
    return %arg0, %c0_i32, %arg1 : i32, i32, i32
  }
  func.func @transform_2(%arg0: i32, %arg1: i32, %arg2: i32) -> (i32, i32) {
    %c0_i32 = arith.constant 0 : i32
    %c0_i32_0 = arith.constant 0 : i32
    return %arg2, %c0_i32 : i32, i32
  }
  func.func @transform_3(%arg0: i32, %arg1: i32, %arg2: i32) -> (i32, i32, i32) {
    %c0_i32 = arith.constant 0 : i32
    return %arg0, %arg2, %arg1 : i32, i32, i32
  }
}

</mosaic_0001>

<llo_original>
// kernel: tpu_custom_call.1
$region0: #{tpu_custom_call.1}
  #allocation0 [shape = 'u32[]', space=smem, size = 0x4, offset = 0x4, fixed_abs, tag = 'smem constant byte address 0x4 - core index']
  #allocation1 [shape = 'u32[72,128]{1,0:T(1,128)}', space=vmem, size = 0x9000, scoped, tag = 'internal scratch']
  %s0 = inlined_call_operand.vmem [shape: bf16[8,36], index: 0, kind: input, shape index: {}]
  %s1 = inlined_call_operand.vmem [shape: bf16[2,36,256], index: 1, kind: input, shape index: {}]
  %s2 = inlined_call_operand.vmem [shape: f32[8,1], index: 2, kind: input, shape index: {}]
  %s3 = inlined_call_operand.hbm [shape: f32[2,8,256], index: 3, kind: output, shape index: {}]
  %s4 = sld [smem:[#allocation0]]
  $region45: #{tpu_custom_call.1} parent=0
    _
  %s6 = ssub.s32 1, %s4
  %s7 = scalar_select 0, %s6, %s4
  $region1: #{tpu_custom_call.1} parent=0
    #allocation2 [shape = 'u8[16384]{0}', space=vmem, size = 0x4000, scoped, tag = 'output window, operand 0']
    #allocation3 [shape = 's32[2]{0}', space=sflag, size = 0x8, scoped, tag = 'scoped memory for tpu_custom_call.1']
    %8 = vsyncpa [#allocation3], 0
    %s9 = scalar_lea.sflag [#allocation3], 1
    %10 = vsyncpa %s9, 0
    loop: start=0, step=1, limit=4
    $region2: #{tpu_custom_call.1} parent=1 // loop_pre_header
      _
    $region3: #{tpu_custom_call.1} parent=1 // loop_header
      %s12 = sphi 0, %s16
      %p13 = scmp.ge.s32.totalorder %s12, 4
      %s19 = sphi 0, %s38
      %s20 = sphi 0, %s34
      %s21 = sphi 0, %s30
      %s22 = sphi 0, %s19
      %s23 = sphi 0, %s20
      %s24 = sphi 0, %s21
      %s25 = sphi 0, %s22
      %s26 = sphi 0, %s23
      %s27 = sphi 0, %s24
      %s41 = sphi 0, %s43
      %s44 = sphi 0, %s41
      %s45 = sphi 0, %s44
      %s61 = sphi 0, %s45
      %s69 = sphi 0, %s71
      %s72 = sphi 0, %s69
      %s73 = sphi 0, %s72
      %s89 = sphi 0, %s73
      %s95 = sphi 0, %s97
      %s98 = sphi 0, %s95
      %s99 = sphi 0, %s98
      %s115 = sphi 0, %s99
      %s125 = sphi 0, %s127
      %s128 = sphi 0, %s125
      %s129 = sphi 0, %s128
      %s145 = sphi 0, %s129
    $region4: #{tpu_custom_call.1} parent=1 // loop_header_branch
      %15 = sbr.rel (%p13) target = $region8
    $region5: #{tpu_custom_call.1} parent=1 // loop_body
      %s17 = ssub.s32 %s12, 1
      %s18 = ssub.s32 %s12, 2
      %s28 = sadd.s32 1, %s21
      %p29 = scmp.ge.s32.totalorder %s28, 1
      %s30 = scalar_select %p29, 0, %s28
      %s31 = sadd.s32 1, %s20
      %s32 = scalar_select %p29, %s31, %s20
      %p33 = scmp.ge.s32.totalorder %s32, 1
      %s34 = scalar_select %p33, 0, %s32
      %s35 = sadd.s32 1, %s19
      %s36 = scalar_select %p33, %s35, %s19
      %p37 = scmp.ge.s32.totalorder %s36, 2
      %s38 = scalar_select %p37, 0, %s36
      %s39 = ssub.s32 %s21, %s30
      %p40 = scmp.eq.s32.totalorder %s39, 0
      %s42 = sadd.s32 %s41, 1
      %s43 = scalar_select %p40, %s41, %s42
      %p46 = pneg %p40
      %p47 = scmp.eq.s32.totalorder %s12, 1
      %p48 = por %p46, %p47
      %p49 = scmp.ne.s32.totalorder %s41, %s44
      %p50 = scmp.eq.s32.totalorder %s12, 0
      %p51 = por %p49, %p50
      %p52 = scmp.ne.s32.totalorder %s41, %s44
      %p53 = scmp.eq.s32.totalorder %s17, 1
      %p54 = por %p52, %p53
      %p55 = scmp.ne.s32.totalorder %s44, %s45
      %p56 = scmp.eq.s32.totalorder %s17, 0
      %p57 = por %p55, %p56
      %p58 = scmp.ne.s32.totalorder %s44, %s45
      %p59 = scmp.eq.s32.totalorder %s18, 1
      %p60 = por %p58, %p59
      %p62 = scmp.ne.s32.totalorder %s45, %s61
      %p63 = scmp.eq.s32.totalorder %s18, 0
      %p64 = por %p62, %p63
      %s65 = ssub.s32 %s19, %s38
      %s66 = ssub.s32 %s20, %s34
      %s67 = sor.u32 %s65, %s66
      %p68 = scmp.eq.s32.totalorder %s67, 0
      %s70 = sadd.s32 %s69, 1
      %s71 = scalar_select %p68, %s69, %s70
      %p74 = pneg %p68
      %p75 = scmp.eq.s32.totalorder %s12, 1
      %p76 = por %p74, %p75
      %p77 = scmp.ne.s32.totalorder %s69, %s72
      %p78 = scmp.eq.s32.totalorder %s12, 0
      %p79 = por %p77, %p78
      %p80 = scmp.ne.s32.totalorder %s69, %s72
      %p81 = scmp.eq.s32.totalorder %s17, 1
      %p82 = por %p80, %p81
      %p83 = scmp.ne.s32.totalorder %s72, %s73
      %p84 = scmp.eq.s32.totalorder %s17, 0
      %p85 = por %p83, %p84
      %p86 = scmp.ne.s32.totalorder %s72, %s73
      %p87 = scmp.eq.s32.totalorder %s18, 1
      %p88 = por %p86, %p87
      %p90 = scmp.ne.s32.totalorder %s73, %s89
      %p91 = scmp.eq.s32.totalorder %s18, 0
      %p92 = por %p90, %p91
      %s93 = ssub.s32 %s21, %s30
      %p94 = scmp.eq.s32.totalorder %s93, 0
      %s96 = sadd.s32 %s95, 1
      %s97 = scalar_select %p94, %s95, %s96
      %p100 = pneg %p94
      %p101 = scmp.eq.s32.totalorder %s12, 1
      %p102 = por %p100, %p101
      %p103 = scmp.ne.s32.totalorder %s95, %s98
      %p104 = scmp.eq.s32.totalorder %s12, 0
      %p105 = por %p103, %p104
      %p106 = scmp.ne.s32.totalorder %s95, %s98
      %p107 = scmp.eq.s32.totalorder %s17, 1
      %p108 = por %p106, %p107
      %p109 = scmp.ne.s32.totalorder %s98, %s99
      %p110 = scmp.eq.s32.totalorder %s17, 0
      %p111 = por %p109, %p110
      %p112 = scmp.ne.s32.totalorder %s98, %s99
      %p113 = scmp.eq.s32.totalorder %s18, 1
      %p114 = por %p112, %p113
      %p116 = scmp.ne.s32.totalorder %s99, %s115
      %p117 = scmp.eq.s32.totalorder %s18, 0
      %p118 = por %p116, %p117
      %s119 = ssub.s32 %s19, %s38
      %s120 = ssub.s32 %s21, %s30
      %s121 = sor.u32 %s119, %s120
      %s122 = ssub.s32 %s20, %s34
      %s123 = sor.u32 %s121, %s122
      %p124 = scmp.eq.s32.totalorder %s123, 0
      %s126 = sadd.s32 %s125, 1
      %s127 = scalar_select %p124, %s125, %s126
      %p130 = pneg %p124
      %p131 = scmp.eq.s32.totalorder %s12, 1
      %p132 = por %p130, %p131
      %p133 = scmp.ne.s32.totalorder %s125, %s128
      %p134 = scmp.eq.s32.totalorder %s12, 0
      %p135 = por %p133, %p134
      %p136 = scmp.ne.s32.totalorder %s125, %s128
      %p137 = scmp.eq.s32.totalorder %s17, 1
      %p138 = por %p136, %p137
      %p139 = scmp.ne.s32.totalorder %s128, %s129
      %p140 = scmp.eq.s32.totalorder %s17, 0
      %p141 = por %p139, %p140
      %p142 = scmp.ne.s32.totalorder %s128, %s129
      %p143 = scmp.eq.s32.totalorder %s18, 1
      %p144 = por %p142, %p143
      %p146 = scmp.ne.s32.totalorder %s129, %s145
      %p147 = scmp.eq.s32.totalorder %s18, 0
      %p148 = por %p146, %p147
      %p149 = scmp.le.s32.totalorder 1, %s12
      %p150 = scmp.lt.s32.totalorder %s12, 3
      %p151 = pnand %p149, %p150
      %p152 = pneg %p151
      // Predicated region
      $region9: #{tpu_custom_call.1} parent=5 // pred_check
        _
      $region10: #{tpu_custom_call.1} parent=5 // pred_check_branch
        %154 = sbr.rel (%p151) target = $region12
      $region11: #{tpu_custom_call.1} parent=5 // pred_region
        %s155 = ssub.s32 %s12, 1
        // Predicated region
        $region13: #{tpu_custom_call.1} parent=11 // pred_check
          %p156 = pneg %p57
        $region14: #{tpu_custom_call.1} parent=11 // pred_check_branch
          %158 = sbr.rel (%p156) target = $region16
        $region15: #{tpu_custom_call.1} parent=11 // pred_region
          %p159 = scmp.lt.s32.totalorder %s24, 0
          %s160 = scalar_select %p159, %s24, 0
          %s161 = smul.addr %s160, 4
          %s162 = scalar_lea.vmem %s0, %s161
        $region16: #{tpu_custom_call.1} parent=11 // pred_fallthru
          _
        // Predicated region
        $region17: #{tpu_custom_call.1} parent=11 // pred_check
          %p163 = pneg %p111
        $region18: #{tpu_custom_call.1} parent=11 // pred_check_branch
          %165 = sbr.rel (%p163) target = $region20
        $region19: #{tpu_custom_call.1} parent=11 // pred_region
          %p166 = scmp.lt.s32.totalorder %s24, 0
          %s167 = scalar_select %p166, %s24, 0
          %s168 = smul.addr %s167, 8
          %s169 = scalar_lea.vmem %s2, %s168
        $region20: #{tpu_custom_call.1} parent=11 // pred_fallthru
          _
      $region12: #{tpu_custom_call.1} parent=5 // pred_fallthru
        _
      %p170 = scmp.lt.s32.totalorder %s12, 2
      // Predicated region
      $region21: #{tpu_custom_call.1} parent=5 // pred_check
        %p171 = pneg %p170
      $region22: #{tpu_custom_call.1} parent=5 // pred_check_branch
        %173 = sbr.rel (%p171) target = $region24
      $region23: #{tpu_custom_call.1} parent=5 // pred_region
        // Predicated region
        $region25: #{tpu_custom_call.1} parent=23 // pred_check
          %p174 = pneg %p79
        $region26: #{tpu_custom_call.1} parent=23 // pred_check_branch
          %176 = sbr.rel (%p174) target = $region28
        $region27: #{tpu_custom_call.1} parent=23 // pred_region
          %s177 = smul.u32 2, %s20
          %p178 = scmp.lt.s32.totalorder %s19, 1
          %s179 = scalar_select %p178, %s19, 1
          %p180 = scmp.lt.s32.totalorder %s177, 1
          %s181 = scalar_select %p180, %s177, 1
          %s182 = smul.addr %s179, 10
          %s183 = sadd.s32 %s181, %s182
          %s184 = smul.addr %s183, 4
          %s185 = scalar_lea.vmem %s1, %s184
          %s186 = smul.u32 2, %s20
        $region28: #{tpu_custom_call.1} parent=23 // pred_fallthru
          _
      $region24: #{tpu_custom_call.1} parent=5 // pred_fallthru
        _
      %p187 = scmp.le.s32.totalorder 1, %s12
      %p188 = scmp.lt.s32.totalorder %s12, 3
      %p189 = pnand %p187, %p188
      %p190 = pneg %p189
      // Predicated region
      $region29: #{tpu_custom_call.1} parent=5 // pred_check
        _
      $region30: #{tpu_custom_call.1} parent=5 // pred_check_branch
        %192 = sbr.rel (%p189) target = $region32
      $region31: #{tpu_custom_call.1} parent=5 // pred_region
        %s193 = ssub.s32 %s12, 1
        %p194 = scmp.lt.s32.totalorder %s24, 0
        %s195 = scalar_select %p194, %s24, 0
        %s196 = smul.addr %s195, 4
        %s197 = scalar_lea.vmem %s0, %s196
        %p198 = pneg %p57
        %p199 = pneg %p54
        %s200 = smul.u32 2, %s23
        %p201 = scmp.lt.s32.totalorder %s22, 1
        %s202 = scalar_select %p201, %s22, 1
        %p203 = scmp.lt.s32.totalorder %s200, 1
        %s204 = scalar_select %p203, %s200, 1
        %s205 = smul.addr %s202, 10
        %s206 = sadd.s32 %s204, %s205
        %s207 = smul.addr %s206, 4
        %s208 = scalar_lea.vmem %s1, %s207
        %p209 = pneg %p85
        %p210 = pneg %p82
        %p211 = scmp.lt.s32.totalorder %s24, 0
        %s212 = scalar_select %p211, %s24, 0
        %s213 = smul.addr %s212, 8
        %s214 = scalar_lea.vmem %s2, %s213
        %p215 = pneg %p111
        %p216 = pneg %p108
        %p217 = pneg %p141
        %p218 = pneg %p138
        %s219 = sand.u32 %s128, 1
        %s220 = scalar_lea.sflag [#allocation3], %s219
        %s221 = sand.u32 %s128, 1
        %s222 = smul.addr %s221, 16
        %s223 = scalar_lea.vmem [#allocation2], %s222
        %p224 = scmp.lt.s32.totalorder %s24, 0
        %s225 = scalar_select %p224, %s24, 0
        %s226 = smul.addr %s225, 4
        %s227 = scalar_lea.vmem %s0, %s226
        %s228 = smul.u32 2, %s23
        %p229 = scmp.lt.s32.totalorder %s22, 1
        %s230 = scalar_select %p229, %s22, 1
        %p231 = scmp.lt.s32.totalorder %s228, 1
        %s232 = scalar_select %p231, %s228, 1
        %s233 = smul.addr %s230, 10
        %s234 = sadd.s32 %s232, %s233
        %s235 = smul.addr %s234, 4
        %s236 = scalar_lea.vmem %s1, %s235
        %s237 = smul.u32 2, %s23
        %p238 = scmp.lt.s32.totalorder %s24, 0
        %s239 = scalar_select %p238, %s24, 0
        %s240 = smul.addr %s239, 8
        %s241 = scalar_lea.vmem %s2, %s240
        %s242 = smul.u32 2, %s23
        %v244 = vld [vmem:[%s227] sm:$0xf]
        %v245 = vld [vmem:[%s236] sm:$0xff]
        %v246 = vld [vmem:[%s236 + $0x8] sm:$0xff]
        %v247 = vld [vmem:[%s236 + $0x10] sm:$0xff]
        %v248 = vld [vmem:[%s236 + $0x18] sm:$0xff]
        %v249 = vld [vmem:[%s236 + $0x20] sm:$0x33]
        %v250 = vld [vmem:[%s241] sm:$0xff]
        %252 = vset.pattern.permute.xlu0 0
        %253 = vperm.xlu0 %252, %v250
        %v254 = vpop.permute.xlu0 %253
        %v261 = vunpack.c.l.b16 %v245
        %v262 = vunpack.c.h.b16 %v245
        %v263 = vunpack.c.l.b16 %v246
        %v264 = vunpack.c.h.b16 %v246
        %v265 = vunpack.c.l.b16 %v247
        %v266 = vunpack.c.h.b16 %v247
        %v267 = vunpack.c.l.b16 %v248
        %v268 = vunpack.c.h.b16 %v248
        %v269 = vunpack.c.l.b16 %v249
        %v270 = vunpack.c.h.b16 %v249
        %v271 = vpack.c.b16 %v263, %v261
        %v272 = vpack.c.b16 %v264, %v262
        %v273 = vpack.c.b16 %v267, %v265
        %v274 = vpack.c.b16 %v268, %v266
        %v275 = vpack.c.b16 %v269, %v269
        %v276 = vpack.c.b16 %v270, %v270
        %vm281 = vcmask 293888
        %v283 = vsel %vm281, %v244, 0
        %vm285 = vcmask 1041408
        %v287 = vsel %vm285, %v275, 0
        %v290 = vsel %vm285, %v276, 0
        %292 = vmatpush.bf16.msra.mxu0 0
        %293 = vmatpush.bf16.msra.mxu0 0
        %294 = vmatpush.bf16.msra.mxu0 0
        %295 = vmatpush.bf16.msra.mxu0 0
        %296 = vmatpush.bf16.msra.mxu0 0
        %297 = vmatpush.bf16.msra.mxu0 %v287
        %298 = vmatpush.bf16.msra.mxu0 %v273
        %299 = vmatpush.bf16.msra.mxu0 %v271
        %300 = vmatmul.bf16.gmra.mxu0 %v283
        %v301 = vpop.f32.mrf.mxu0
        %v302 = vadd.f32 %v254, %v301
        %v303 = vpop.f32.mrf.mxu0
        %304 = vdwg.mxu0
        %305 = vmatpush.bf16.msra.mxu0 0
        %306 = vmatpush.bf16.msra.mxu0 0
        %307 = vmatpush.bf16.msra.mxu0 0
        %308 = vmatpush.bf16.msra.mxu0 0
        %309 = vmatpush.bf16.msra.mxu0 0
        %310 = vmatpush.bf16.msra.mxu0 %v290
        %311 = vmatpush.bf16.msra.mxu0 %v274
        %312 = vmatpush.bf16.msra.mxu0 %v272
        %313 = vmatmul.bf16.gmra.mxu0 %v283
        %v314 = vpop.f32.mrf.mxu0
        %v315 = vadd.f32 %v254, %v314
        %v316 = vpop.f32.mrf.mxu0
        %317 = vdwg.mxu0
        %v318 = vmax.f32 %v302, 0.0
        %v319 = vmax.f32 %v315, 0.0
        %320 = vst [vmem:[%s223] sm:$0xff] %v318
        %321 = vst [vmem:[%s223 + $0x8] sm:$0xff] %v319
        %s322 = sand.u32 %s128, 1
        %s323 = scalar_lea.sflag [#allocation3], %s322
        %s324 = sand.u32 %s128, 1
        %s325 = smul.addr %s324, 16
        %s326 = scalar_lea.vmem [#allocation2], %s325
        // Predicated region
        $region33: #{tpu_custom_call.1} parent=31 // pred_check
          %p327 = pneg %p138
        $region34: #{tpu_custom_call.1} parent=31 // pred_check_branch
          %329 = sbr.rel (%p327) target = $region36
        $region35: #{tpu_custom_call.1} parent=31 // pred_region
          %s330 = smul.u32 2, %s23
          %332 = vsyncadd %s323, 0
          %s333 = smul.addr %s24, 2
          %s334 = sadd.s32 %s330, %s333
          %s335 = smul.addr %s22, 2
          %s336 = sadd.s32 %s334, %s335
          %s337 = smul.addr %s336, 8
          %s338 = scalar_lea.hbm %s3, %s337
          %s340 = sshll.u32 %s326, 4
          %s341 = int_to_ptr.vmem [resolvable:$true] %s340
          %s342 = sshll.u32 %s338, 4
          %s343 = int_to_ptr.hbm [resolvable:$true] %s342
          %345 = dma.vmem_to_hbm [thread:$0]  %s341, 256, %s343, %s323
        $region36: #{tpu_custom_call.1} parent=31 // pred_fallthru
          _
      $region32: #{tpu_custom_call.1} parent=5 // pred_fallthru
        _
      %p346 = scmp.le.s32.totalorder 2, %s12
      // Predicated region
      $region37: #{tpu_custom_call.1} parent=5 // pred_check
        %p347 = pneg %p346
      $region38: #{tpu_custom_call.1} parent=5 // pred_check_branch
        %349 = sbr.rel (%p347) target = $region40
      $region39: #{tpu_custom_call.1} parent=5 // pred_region
        %s350 = ssub.s32 %s12, 2
        // Predicated region
        $region41: #{tpu_custom_call.1} parent=39 // pred_check
          %p351 = pneg %p144
        $region42: #{tpu_custom_call.1} parent=39 // pred_check_branch
          %353 = sbr.rel (%p351) target = $region44
        $region43: #{tpu_custom_call.1} parent=39 // pred_region
          %s354 = sand.u32 %s129, 1
          %s355 = scalar_lea.sflag [#allocation3], %s354
          %s356 = sand.u32 %s129, 1
          %s357 = smul.addr %s356, 16
          %s358 = scalar_lea.vmem [#allocation2], %s357
          %360 = dma.done %s355, 256
        $region44: #{tpu_custom_call.1} parent=39 // pred_fallthru
          _
      $region40: #{tpu_custom_call.1} parent=5 // pred_fallthru
        _
    $region6: #{tpu_custom_call.1} parent=1 // loop_footer
      %s16 = sadd.s32 1, %s12
    $region7: #{tpu_custom_call.1} parent=1 // loop_footer_branch
      %11 = sbr.rel target = $region3
    $region8: #{tpu_custom_call.1} parent=1 // loop_exit
      _
    %361 = vsyncpa [#allocation3], 1
    %s362 = scalar_lea.sflag [#allocation3], 1
    %363 = vsyncpa %s362, 1

</llo_original>
